<compile_context>
chip_gen: v7x
topology: tpu7x:2x2x1
jax: 0.10.0
libtpu: 0.0.40
codegen_flags: <defaults>
</compile_context>

<pallas_src>
import functools
import math

import jax
import jax.numpy as jnp
from jax import lax
from jax.experimental import pallas as pl
from jax.experimental.pallas import tpu as pltpu


_NEG_INF = float("-inf")
_VMEM_LIMIT = 48 * 1024 * 1024  # headroom under v7x's 64 MiB physical VMEM


def _causal_mask(tq, tk):
    row = lax.broadcasted_iota(jnp.int32, (tq, tk), 0)
    col = lax.broadcasted_iota(jnp.int32, (tq, tk), 1)
    return col <= row


def _head_small_kernel(q_ref, k_ref, v_ref, o_ref, *, scale):
    """Whole-sequence causal attention for one batch block (L fits in VMEM)."""
    q = q_ref[...] * scale                                   # (bb, L, D)
    s = jnp.einsum("bqd,bkd->bqk", q, k_ref[...],
                   preferred_element_type=jnp.float32)       # (bb, L, L) f32
    L = s.shape[1]
    s = jnp.where(_causal_mask(L, L)[None, :, :], s, _NEG_INF)
    m = jnp.max(s, axis=-1, keepdims=True)
    p = jnp.exp(s - m)
    l = jnp.sum(p, axis=-1, keepdims=True)
    o = jnp.einsum("bqk,bkd->bqd", p.astype(v_ref.dtype), v_ref[...],
                   preferred_element_type=jnp.float32)
    o_ref[...] = (o * pl.reciprocal(l, approx=True)).astype(o_ref.dtype)


def _head_flash_kernel(q_ref, k_ref, v_ref, o_ref, m_sc, l_sc, acc_sc, *, scale):
    """One (batch-block, q-block, kv-block) step of causal flash attention."""
    qi = pl.program_id(1)
    kj = pl.program_id(2)

    @pl.when(kj == 0)
    def _init():
        m_sc[...] = jnp.full_like(m_sc, _NEG_INF)
        l_sc[...] = jnp.zeros_like(l_sc)
        acc_sc[...] = jnp.zeros_like(acc_sc)

    def _update(on_diag):
        # Fold the 1/sqrt(head_size) scale into Q: (tq, D) multiplies, not (tq, tk).
        q = q_ref[...] * scale            # (bb, tq, D)
        k = k_ref[...]                    # (bb, tk, D)
        v = v_ref[...]                    # (bb, tk, D)

        # Contract on D of both operands -> no materialized K^T; f32 accumulation.
        s = jnp.einsum("bqd,bkd->bqk", q, k,
                       preferred_element_type=jnp.float32)   # (bb, tq, tk) f32

        if on_diag:
            # tq == tk and qi == kj here, so the local iota mask equals the
            # global causal (tril) mask restricted to this block.
            tq, tk = s.shape[1], s.shape[2]
            s = jnp.where(_causal_mask(tq, tk)[None, :, :], s, _NEG_INF)

        m_prev = m_sc[...]
        m_new = jnp.maximum(m_prev, jnp.max(s, axis=-1, keepdims=True))
        alpha = jnp.exp(m_prev - m_new)
        p = jnp.exp(s - m_new)
        l_sc[...] = alpha * l_sc[...] + jnp.sum(p, axis=-1, keepdims=True)
        acc_sc[...] = alpha * acc_sc[...] + jnp.einsum(
            "bqk,bkd->bqd", p.astype(v.dtype), v,
            preferred_element_type=jnp.float32)
        m_sc[...] = m_new

    @pl.when(kj < qi)
    def _below_diag():
        _update(on_diag=False)

    @pl.when(kj == qi)
    def _diag_and_finalize():
        _update(on_diag=True)
        # Causal: the diagonal block is the last contributor for this q row,
        # so normalize and emit now; kv blocks above the diagonal do nothing.
        # Approximate reciprocal runs on the (otherwise idle) EUP slot.
        o_ref[...] = (acc_sc[...] * pl.reciprocal(l_sc[...], approx=True)
                      ).astype(o_ref.dtype)


def head_forward(key, query, value, head_size, *, block_q=128, block_b=None):
    """Pallas implementation of Head.forward (dropout = identity / eval mode)."""
    B, L, D = key.shape
    assert query.shape == (B, L, D) and value.shape == (B, L, D)
    scale = 1.0 / math.sqrt(head_size)
    dtype = query.dtype

    # ------------------------------------------------------------------ small
    if L <= block_q:
        if block_b is None:
            # Pack as much of the batch as comfortably fits (f32 footprint of
            # the score matrix + q/k/v/o tiles), whole batch for tiny L.
            per_b = (L * L + 4 * L * D) * 4
            bb = max(1, min(B, (8 << 20) // max(per_b, 1)))
            while B % bb:
                bb -= 1
        else:
            bb = block_b
        assert B % bb == 0
        spec = pl.BlockSpec((bb, L, D), lambda b: (b, 0, 0))
        return pl.pallas_call(
            functools.partial(_head_small_kernel, scale=scale),
            out_shape=jax.ShapeDtypeStruct((B, L, D), dtype),
            grid=(B // bb,),
            in_specs=[spec, spec, spec],
            out_specs=spec,
            compiler_params=pltpu.CompilerParams(
                dimension_semantics=("parallel",),
                vmem_limit_bytes=_VMEM_LIMIT,
            ),
        )(query, key, value)

    # ------------------------------------------------------------------ flash
    # Square sequence tiles (tq == tk): the diagonal-block mask stays local and
    # causal block skipping is exact.
    tq = block_q
    tk = tq
    assert L % tq == 0 and tq % 8 == 0, \
        "sequence tile must divide L and respect the (8,128) tiling"

    # Batch-block: pack the batch while the tiles stay small.
    if block_b is None:
        bb = B if B * tq * D * dtype.itemsize <= (2 << 20) else 1
    else:
        bb = block_b
    assert B % bb == 0

    grid = (B // bb, L // tq, L // tk)

    q_spec = pl.BlockSpec((bb, tq, D), lambda b, qi, kj: (b, qi, 0))
    # Causal skipping: blocks strictly above the diagonal are never used, so
    # remap their kv block index to 0 -> their DMAs are elided and block 0 of
    # the next q row is prefetched while the diagonal block computes.
    kv_spec = pl.BlockSpec(
        (bb, tk, D), lambda b, qi, kj: (b, jnp.where(kj <= qi, kj, 0), 0))
    o_spec = pl.BlockSpec((bb, tq, D), lambda b, qi, kj: (b, qi, 0))

    return pl.pallas_call(
        functools.partial(_head_flash_kernel, scale=scale),
        out_shape=jax.ShapeDtypeStruct((B, L, D), dtype),
        grid=grid,
        in_specs=[q_spec, kv_spec, kv_spec],
        out_specs=o_spec,
        scratch_shapes=[
            pltpu.VMEM((bb, tq, 1), jnp.float32),   # running max  m
            pltpu.VMEM((bb, tq, 1), jnp.float32),   # running sum  l
            pltpu.VMEM((bb, tq, D), jnp.float32),   # output accumulator
        ],
        compiler_params=pltpu.CompilerParams(
            dimension_semantics=("parallel", "parallel", "arbitrary"),
            vmem_limit_bytes=_VMEM_LIMIT,
        ),
    )(query, key, value)


def _reference(key, query, value, head_size):
    B, L, D = key.shape
    s = jnp.einsum("bld,bmd->blm", query, key) / math.sqrt(head_size)
    mask = jnp.tril(jnp.ones((L, L), dtype=bool))
    s = jnp.where(mask, s, -jnp.inf)
    p = jax.nn.softmax(s, axis=-1)
    return jnp.einsum("blm,bmd->bld", p, value)


if __name__ == "__main__":
    # Small config consistent with the module: prefill_size (= L) = 8, head_size = 32
    B, L, D = 2, 8, 32
    rng = jax.random.PRNGKey(0)
    kk, kq, kv = jax.random.split(rng, 3)
    key = jax.random.normal(kk, (B, L, D), dtype=jnp.float32)
    query = jax.random.normal(kq, (B, L, D), dtype=jnp.float32)
    value = jax.random.normal(kv, (B, L, D), dtype=jnp.float32)

    out = jax.block_until_ready(head_forward(key, query, value, head_size=D))
    ref = _reference(key, query, value, head_size=D)
    assert out.shape == (B, L, D)
    # approx=True reciprocal (EUP vrcp) in the softmax normalization -> slightly
    # looser tolerance than the exact-division reference.
    assert jnp.allclose(out, ref, atol=5e-3, rtol=5e-3), \
        float(jnp.max(jnp.abs(out - ref)))

    # Also exercise the multi-block flash path (longer sequence, still small).
    L2 = 256
    kk2, kq2, kv2 = jax.random.split(jax.random.PRNGKey(1), 3)
    key2 = jax.random.normal(kk2, (B, L2, D), dtype=jnp.float32)
    query2 = jax.random.normal(kq2, (B, L2, D), dtype=jnp.float32)
    value2 = jax.random.normal(kv2, (B, L2, D), dtype=jnp.float32)
    out2 = jax.block_until_ready(
        head_forward(key2, query2, value2, head_size=D, block_q=128))
    ref2 = _reference(key2, query2, value2, head_size=D)
    assert out2.shape == (B, L2, D)
    assert jnp.allclose(out2, ref2, atol=5e-3, rtol=5e-3), \
        float(jnp.max(jnp.abs(out2 - ref2)))

    print("KERNEL_OK")
</pallas_src>

<mosaic_0001>
module attributes {stable_mosaic.version = 11 : i64} {
  func.func @_head_small_kernel(%arg0: i32, %arg1: memref<2x8x32xf32, #tpu.memory_space<vmem>>, %arg2: memref<2x8x32xf32, #tpu.memory_space<vmem>>, %arg3: memref<2x8x32xf32, #tpu.memory_space<vmem>>, %arg4: memref<2x8x32xf32, #tpu.memory_space<vmem>>) attributes {dimension_semantics = [#tpu.dimension_semantics<parallel>], iteration_bounds = array<i64: 1>, scalar_prefetch = 0 : i64, scratch_operands = 0 : i64, tpu.core_type = #tpu.core_type<tc>, window_params = [{transform_indices = @transform_0, window_bounds = array<i64: 2, 8, 32>}, {transform_indices = @transform_1, window_bounds = array<i64: 2, 8, 32>}, {transform_indices = @transform_2, window_bounds = array<i64: 2, 8, 32>}, {transform_indices = @transform_3, window_bounds = array<i64: 2, 8, 32>}]} {
    %c0 = arith.constant 0 : index
    %c0_0 = arith.constant 0 : index
    %c0_1 = arith.constant 0 : index
    %0 = vector.load %arg1[%c0, %c0_0, %c0_1] : memref<2x8x32xf32, #tpu.memory_space<vmem>>, vector<2x8x32xf32>
    %cst = arith.constant 0.176776692 : f32
    %1 = vector.broadcast %cst : f32 to vector<2x8x32xf32>
    %2 = arith.mulf %0, %1 : vector<2x8x32xf32>
    %c0_2 = arith.constant 0 : index
    %c0_3 = arith.constant 0 : index
    %c0_4 = arith.constant 0 : index
    %3 = vector.load %arg2[%c0_2, %c0_3, %c0_4] : memref<2x8x32xf32, #tpu.memory_space<vmem>>, vector<2x8x32xf32>
    "tpu.trace_start"() <{level = 10 : i32, message = "bqd,bkd->bqk"}> : () -> ()
    %cst_5 = arith.constant dense<0.000000e+00> : vector<2x8x8xf32>
    %4 = tpu.matmul %2, %3, %cst_5 {dimension_numbers = #tpu.dot_dimension_numbers<[2], [2], [1], [1], [0, 0, 0, 1, 1, 1], [0], [0]>} : vector<2x8x32xf32>, vector<2x8x32xf32>, vector<2x8x8xf32> -> vector<2x8x8xf32>
    "tpu.trace_stop"() : () -> ()
    %5 = tpu.iota {dimensions = array<i32: 0>} : vector<8x8xi32>
    %6 = tpu.iota {dimensions = array<i32: 1>} : vector<8x8xi32>
    %7 = arith.cmpi sle, %6, %5 : vector<8x8xi32>
    %8 = vector.shape_cast %7 : vector<8x8xi1> to vector<1x8x8xi1>
    %cst_6 = arith.constant 0xFF800000 : f32
    %9 = vector.shape_cast %8 : vector<1x8x8xi1> to vector<1x8x8xi1>
    %10 = vector.broadcast %9 : vector<1x8x8xi1> to vector<2x8x8xi1>
    %11 = vector.broadcast %cst_6 : f32 to vector<2x8x8xf32>
    %12 = arith.select %10, %4, %11 : vector<2x8x8xi1>, vector<2x8x8xf32>
    %cst_7 = arith.constant dense<0xFF800000> : vector<2x8xf32>
    %13 = vector.multi_reduction <maximumf>, %12, %cst_7 [2] : vector<2x8x8xf32> to vector<2x8xf32>
    %14 = vector.shape_cast %13 : vector<2x8xf32> to vector<2x8x1xf32>
    %15 = vector.broadcast %14 : vector<2x8x1xf32> to vector<2x8x8xf32>
    %16 = arith.subf %12, %15 : vector<2x8x8xf32>
    %17 = math.exp %16 : vector<2x8x8xf32>
    %cst_8 = arith.constant dense<0.000000e+00> : vector<2x8xf32>
    %18 = vector.multi_reduction <add>, %17, %cst_8 [2] : vector<2x8x8xf32> to vector<2x8xf32>
    %19 = vector.shape_cast %18 : vector<2x8xf32> to vector<2x8x1xf32>
    %c0_9 = arith.constant 0 : index
    %c0_10 = arith.constant 0 : index
    %c0_11 = arith.constant 0 : index
    %20 = vector.load %arg3[%c0_9, %c0_10, %c0_11] : memref<2x8x32xf32, #tpu.memory_space<vmem>>, vector<2x8x32xf32>
    "tpu.trace_start"() <{level = 10 : i32, message = "bqk,bkd->bqd"}> : () -> ()
    %cst_12 = arith.constant dense<0.000000e+00> : vector<2x8x32xf32>
    %21 = tpu.matmul %17, %20, %cst_12 {dimension_numbers = #tpu.dot_dimension_numbers<[2], [1], [1], [2], [0, 0, 0, 1, 1, 2], [0], [0]>} : vector<2x8x8xf32>, vector<2x8x32xf32>, vector<2x8x32xf32> -> vector<2x8x32xf32>
    "tpu.trace_stop"() : () -> ()
    %22 = tpu.reciprocal %19 {approx = true} : vector<2x8x1xf32> -> vector<2x8x1xf32>
    %23 = vector.broadcast %22 : vector<2x8x1xf32> to vector<2x8x32xf32>
    %24 = arith.mulf %21, %23 : vector<2x8x32xf32>
    %c0_13 = arith.constant 0 : index
    %c0_14 = arith.constant 0 : index
    %c0_15 = arith.constant 0 : index
    %25 = vector.load %arg4[%c0_13, %c0_14, %c0_15] : memref<2x8x32xf32, #tpu.memory_space<vmem>>, vector<2x8x32xf32>
    tpu.vector_store %arg4[%c0_13, %c0_14, %c0_15], %24 {strides = array<i32>} : memref<2x8x32xf32, #tpu.memory_space<vmem>>, vector<2x8x32xf32>,
    return
  }
  func.func @transform_0(%arg0: i32) -> (i32, i32, i32) {
    %c0_i32 = arith.constant 0 : i32
    %c0_i32_0 = arith.constant 0 : i32
    %c0_i32_1 = arith.constant 0 : i32
    return %arg0, %c0_i32, %c0_i32_0 : i32, i32, i32
  }
  func.func @transform_1(%arg0: i32) -> (i32, i32, i32) {
    %c0_i32 = arith.constant 0 : i32
    %c0_i32_0 = arith.constant 0 : i32
    %c0_i32_1 = arith.constant 0 : i32
    return %arg0, %c0_i32, %c0_i32_0 : i32, i32, i32
  }
  func.func @transform_2(%arg0: i32) -> (i32, i32, i32) {
    %c0_i32 = arith.constant 0 : i32
    %c0_i32_0 = arith.constant 0 : i32
    %c0_i32_1 = arith.constant 0 : i32
    return %arg0, %c0_i32, %c0_i32_0 : i32, i32, i32
  }
  func.func @transform_3(%arg0: i32) -> (i32, i32, i32) {
    %c0_i32 = arith.constant 0 : i32
    %c0_i32_0 = arith.constant 0 : i32
    %c0_i32_1 = arith.constant 0 : i32
    return %arg0, %c0_i32, %c0_i32_0 : i32, i32, i32
  }
}

</mosaic_0001>

<llo_original>
// kernel: tpu_custom_call.1
$region0: #{tpu_custom_call.1}
  #allocation0 [shape = 'u32[]', space=smem, size = 0x4, offset = 0x4, fixed_abs, tag = 'smem constant byte address 0x4 - core index']
  #allocation1 [shape = 'u32[144,128]{1,0:T(1,128)}', space=vmem, size = 0x12000, scoped, tag = 'internal scratch']
  %s0 = inlined_call_operand.hbm [shape: f32[2,8,32], index: 0, kind: input, shape index: {}]
  %s1 = inlined_call_operand.hbm [shape: f32[2,8,32], index: 1, kind: input, shape index: {}]
  %s2 = inlined_call_operand.hbm [shape: f32[2,8,32], index: 2, kind: input, shape index: {}]
  %s3 = inlined_call_operand.hbm [shape: f32[2,8,32], index: 3, kind: output, shape index: {}]
  %s4 = sld [smem:[#allocation0]]
  $region34: #{tpu_custom_call.1} parent=0
    _
  %s6 = ssub.s32 1, %s4
  %s7 = scalar_select 0, %s6, %s4
  $region1: #{tpu_custom_call.1} parent=0
    #allocation2 [shape = 'u8[8192]{0}', space=vmem, size = 0x2000, scoped, tag = 'input window, operand 0, single buffered']
    #allocation3 [shape = 's32[1]{0}', space=sflag, size = 0x4, scoped, tag = 'scoped memory for tpu_custom_call.1']
    #allocation4 [shape = 's32[1]{0}', space=sflag, size = 0x4, scoped, tag = 'scoped memory for tpu_custom_call.1']
    #allocation5 [shape = 'u8[8192]{0}', space=vmem, size = 0x2000, scoped, tag = 'input window, operand 1, single buffered']
    #allocation6 [shape = 's32[1]{0}', space=sflag, size = 0x4, scoped, tag = 'scoped memory for tpu_custom_call.1']
    #allocation7 [shape = 'u8[8192]{0}', space=vmem, size = 0x2000, scoped, tag = 'input window, operand 2, single buffered']
    #allocation8 [shape = 'u8[8192]{0}', space=vmem, size = 0x2000, scoped, tag = 'output window, operand 0, single buffered']
    %8 = vsyncpa [#allocation3], 0
    %9 = vsyncpa [#allocation6], 0
    %10 = vsyncpa [#allocation4], 0
    // Predicated region
    $region2: #{tpu_custom_call.1} parent=1 // pred_check
      _
    $region3: #{tpu_custom_call.1} parent=1 // pred_check_branch
      %12 = sbr.rel (0) target = $region5
    $region4: #{tpu_custom_call.1} parent=1 // pred_region
      %s14 = ssub.s32 256, 256
      %15 = vsyncadd [#allocation3], %s14
      %s16 = sshll.u32 [#allocation2], 4
      %s17 = int_to_ptr.vmem [resolvable:$true] %s16
      %22 = dma.hbm_to_vmem [thread:$0]  %s0, 256, %s17, [#allocation3], 128, 128, 8
    $region5: #{tpu_custom_call.1} parent=1 // pred_fallthru
      _
    // Predicated region
    $region6: #{tpu_custom_call.1} parent=1 // pred_check
      _
    $region7: #{tpu_custom_call.1} parent=1 // pred_check_branch
      %24 = sbr.rel (0) target = $region9
    $region8: #{tpu_custom_call.1} parent=1 // pred_region
      %s26 = ssub.s32 256, 256
      %27 = vsyncadd [#allocation6], %s26
      %s28 = sshll.u32 [#allocation5], 4
      %s29 = int_to_ptr.vmem [resolvable:$true] %s28
      %34 = dma.hbm_to_vmem [thread:$0]  %s1, 256, %s29, [#allocation6], 128, 128, 8
    $region9: #{tpu_custom_call.1} parent=1 // pred_fallthru
      _
    // Predicated region
    $region10: #{tpu_custom_call.1} parent=1 // pred_check
      _
    $region11: #{tpu_custom_call.1} parent=1 // pred_check_branch
      %36 = sbr.rel (0) target = $region13
    $region12: #{tpu_custom_call.1} parent=1 // pred_region
      %s38 = ssub.s32 256, 256
      %39 = vsyncadd [#allocation6], %s38
      %s40 = sshll.u32 [#allocation7], 4
      %s41 = int_to_ptr.vmem [resolvable:$true] %s40
      %46 = dma.hbm_to_vmem [thread:$0]  %s2, 256, %s41, [#allocation6], 128, 128, 8
    $region13: #{tpu_custom_call.1} parent=1 // pred_fallthru
      _
    // Predicated region
    $region14: #{tpu_custom_call.1} parent=1 // pred_check
      _
    $region15: #{tpu_custom_call.1} parent=1 // pred_check_branch
      %48 = sbr.rel (0) target = $region17
    $region16: #{tpu_custom_call.1} parent=1 // pred_region
      %49 = dma.done [#allocation3], 256
    $region17: #{tpu_custom_call.1} parent=1 // pred_fallthru
      _
    // Predicated region
    $region18: #{tpu_custom_call.1} parent=1 // pred_check
      _
    $region19: #{tpu_custom_call.1} parent=1 // pred_check_branch
      %51 = sbr.rel (0) target = $region21
    $region20: #{tpu_custom_call.1} parent=1 // pred_region
      %52 = dma.done [#allocation6], 256
    $region21: #{tpu_custom_call.1} parent=1 // pred_fallthru
      _
    // Predicated region
    $region22: #{tpu_custom_call.1} parent=1 // pred_check
      _
    $region23: #{tpu_custom_call.1} parent=1 // pred_check_branch
      %54 = sbr.rel (0) target = $region25
    $region24: #{tpu_custom_call.1} parent=1 // pred_region
      %55 = dma.done [#allocation6], 256
    $region25: #{tpu_custom_call.1} parent=1 // pred_fallthru
      _
    %v56 = vld [vmem:[#allocation2] sm:$0xff]
    %v57 = vld [vmem:[#allocation2 + $0x8] sm:$0xff]
    %v58 = vmul.f32 %v56, 0.17677669
    %v59 = vmul.f32 %v57, 0.17677669
    %v60 = vld [vmem:[#allocation5] sm:$0xff]
    %v61 = vld [vmem:[#allocation5 + $0x8] sm:$0xff]
    %vm62 = vcmask 261120
    %v64 = vsel %vm62, %v58, 0
    %v67 = vsel %vm62, %v60, 0
    %69 = vmatprep.subr.mxu0 0.0
    %70 = vmatpush1.xpose.msra.mxu0 %v67
    %71 = vmatprep.subr.mxu0 0.0
    %72 = vmatpush1.xpose.msra.mxu0 0.0
    %73 = vmatprep.subr.mxu0 0.0
    %74 = vmatpush1.xpose.msra.mxu0 0.0
    %75 = vmatprep.subr.mxu0 0.0
    %76 = vmatpush1.xpose.msra.mxu0 0.0
    %77 = vmatprep.subr.mxu0 0.0
    %78 = vmatpush1.xpose.msra.mxu0 0.0
    %79 = vmatprep.subr.mxu0 0.0
    %80 = vmatpush1.xpose.msra.mxu0 0.0
    %81 = vmatprep.subr.mxu0 0.0
    %82 = vmatpush1.xpose.msra.mxu0 0.0
    %83 = vmatprep.subr.mxu0 0.0
    %84 = vmatpush1.xpose.msra.mxu0 0.0
    %85 = vmatprep.subr.mxu0 0.0
    %86 = vmatpush1.xpose.msra.mxu0 0.0
    %87 = vmatprep.subr.mxu0 0.0
    %88 = vmatpush1.xpose.msra.mxu0 0.0
    %89 = vmatprep.subr.mxu0 0.0
    %90 = vmatpush1.xpose.msra.mxu0 0.0
    %91 = vmatprep.subr.mxu0 0.0
    %92 = vmatpush1.xpose.msra.mxu0 0.0
    %93 = vmatprep.subr.mxu0 0.0
    %94 = vmatpush1.xpose.msra.mxu0 0.0
    %95 = vmatprep.subr.mxu0 0.0
    %96 = vmatpush1.xpose.msra.mxu0 0.0
    %97 = vmatprep.subr.mxu0 0.0
    %98 = vmatpush1.xpose.msra.mxu0 0.0
    %99 = vmatprep.subr.mxu0 0.0
    %100 = vmatpush1.xpose.msra.mxu0 0.0
    %101 = vmatprep.subr.mxu0 0.0
    %102 = vmatpush1.xpose.msra.mxu0 0.0
    %103 = vmatprep.subr.mxu0 0.0
    %104 = vmatpush1.xpose.msra.mxu0 0.0
    %105 = vmatprep.subr.mxu0 0.0
    %106 = vmatpush1.xpose.msra.mxu0 0.0
    %107 = vmatprep.subr.mxu0 0.0
    %108 = vmatpush1.xpose.msra.mxu0 0.0
    %109 = vmatprep.subr.mxu0 0.0
    %110 = vmatpush1.xpose.msra.mxu0 0.0
    %111 = vmatprep.subr.mxu0 0.0
    %112 = vmatpush1.xpose.msra.mxu0 0.0
    %113 = vmatprep.subr.mxu0 0.0
    %114 = vmatpush1.xpose.msra.mxu0 0.0
    %115 = vmatprep.subr.mxu0 0.0
    %116 = vmatpush1.xpose.msra.mxu0 0.0
    %117 = vmatprep.subr.mxu0 0.0
    %118 = vmatpush1.xpose.msra.mxu0 0.0
    %119 = vmatprep.subr.mxu0 0.0
    %120 = vmatpush1.xpose.msra.mxu0 0.0
    %121 = vmatprep.subr.mxu0 0.0
    %122 = vmatpush1.xpose.msra.mxu0 0.0
    %123 = vmatprep.subr.mxu0 0.0
    %124 = vmatpush1.xpose.msra.mxu0 0.0
    %125 = vmatprep.subr.mxu0 0.0
    %126 = vmatpush1.xpose.msra.mxu0 0.0
    %127 = vmatprep.subr.mxu0 0.0
    %128 = vmatpush1.xpose.msra.mxu0 0.0
    %129 = vmatprep.subr.mxu0 0.0
    %130 = vmatpush1.xpose.msra.mxu0 0.0
    %131 = vmatprep.subr.mxu0 0.0
    %132 = vmatpush1.xpose.msra.mxu0 0.0
    %133 = vmatprep.mubr.f32.mxu0 0.0
    %134 = vmatmul.mubr.f32.gmra.mrb[0].mxu0 %v64
    %v135 = vpop.f32.mrb[0].mxu0
    %v136 = vadd.f32 0.0, %v135
    %v137 = vpop.f32.mrb[0].mxu0
    %138 = vdwg.mxu0
    %v140 = vsel %vm62, %v59, 0
    %v143 = vsel %vm62, %v61, 0
    %145 = vmatprep.subr.mxu0 0.0
    %146 = vmatpush1.xpose.msra.mxu0 %v143
    %147 = vmatprep.subr.mxu0 0.0
    %148 = vmatpush1.xpose.msra.mxu0 0.0
    %149 = vmatprep.subr.mxu0 0.0
    %150 = vmatpush1.xpose.msra.mxu0 0.0
    %151 = vmatprep.subr.mxu0 0.0
    %152 = vmatpush1.xpose.msra.mxu0 0.0
    %153 = vmatprep.subr.mxu0 0.0
    %154 = vmatpush1.xpose.msra.mxu0 0.0
    %155 = vmatprep.subr.mxu0 0.0
    %156 = vmatpush1.xpose.msra.mxu0 0.0
    %157 = vmatprep.subr.mxu0 0.0
    %158 = vmatpush1.xpose.msra.mxu0 0.0
    %159 = vmatprep.subr.mxu0 0.0
    %160 = vmatpush1.xpose.msra.mxu0 0.0
    %161 = vmatprep.subr.mxu0 0.0
    %162 = vmatpush1.xpose.msra.mxu0 0.0
    %163 = vmatprep.subr.mxu0 0.0
    %164 = vmatpush1.xpose.msra.mxu0 0.0
    %165 = vmatprep.subr.mxu0 0.0
    %166 = vmatpush1.xpose.msra.mxu0 0.0
    %167 = vmatprep.subr.mxu0 0.0
    %168 = vmatpush1.xpose.msra.mxu0 0.0
    %169 = vmatprep.subr.mxu0 0.0
    %170 = vmatpush1.xpose.msra.mxu0 0.0
    %171 = vmatprep.subr.mxu0 0.0
    %172 = vmatpush1.xpose.msra.mxu0 0.0
    %173 = vmatprep.subr.mxu0 0.0
    %174 = vmatpush1.xpose.msra.mxu0 0.0
    %175 = vmatprep.subr.mxu0 0.0
    %176 = vmatpush1.xpose.msra.mxu0 0.0
    %177 = vmatprep.subr.mxu0 0.0
    %178 = vmatpush1.xpose.msra.mxu0 0.0
    %179 = vmatprep.subr.mxu0 0.0
    %180 = vmatpush1.xpose.msra.mxu0 0.0
    %181 = vmatprep.subr.mxu0 0.0
    %182 = vmatpush1.xpose.msra.mxu0 0.0
    %183 = vmatprep.subr.mxu0 0.0
    %184 = vmatpush1.xpose.msra.mxu0 0.0
    %185 = vmatprep.subr.mxu0 0.0
    %186 = vmatpush1.xpose.msra.mxu0 0.0
    %187 = vmatprep.subr.mxu0 0.0
    %188 = vmatpush1.xpose.msra.mxu0 0.0
    %189 = vmatprep.subr.mxu0 0.0
    %190 = vmatpush1.xpose.msra.mxu0 0.0
    %191 = vmatprep.subr.mxu0 0.0
    %192 = vmatpush1.xpose.msra.mxu0 0.0
    %193 = vmatprep.subr.mxu0 0.0
    %194 = vmatpush1.xpose.msra.mxu0 0.0
    %195 = vmatprep.subr.mxu0 0.0
    %196 = vmatpush1.xpose.msra.mxu0 0.0
    %197 = vmatprep.subr.mxu0 0.0
    %198 = vmatpush1.xpose.msra.mxu0 0.0
    %199 = vmatprep.subr.mxu0 0.0
    %200 = vmatpush1.xpose.msra.mxu0 0.0
    %201 = vmatprep.subr.mxu0 0.0
    %202 = vmatpush1.xpose.msra.mxu0 0.0
    %203 = vmatprep.subr.mxu0 0.0
    %204 = vmatpush1.xpose.msra.mxu0 0.0
    %205 = vmatprep.subr.mxu0 0.0
    %206 = vmatpush1.xpose.msra.mxu0 0.0
    %207 = vmatprep.subr.mxu0 0.0
    %208 = vmatpush1.xpose.msra.mxu0 0.0
    %209 = vmatprep.mubr.f32.mxu0 0.0
    %210 = vmatmul.mubr.f32.gmra.mrb[0].mxu0 %v140
    %v211 = vpop.f32.mrb[0].mxu0
    %v212 = vadd.f32 0.0, %v211
    %v213 = vpop.f32.mrb[0].mxu0
    %214 = vdwg.mxu0
    %v215 = vlaneseq
    %v216 = vshrl.u32 %v215, 7
    %v217 = vlaneseq
    %v218 = vand.u32 %v217, 127
    %vm219 = vcmp.le.s32.totalorder %v218, %v216
    %v220 = vsel %vm219, 1, 0
    %vm221 = vcmp.eq.s32.totalorder %v220, 1
    %v222 = vsel %vm221, %v136, -inf
    %v223 = vsel %vm221, %v212, -inf
    %vm224 = vcmask 64512
    %v225 = vsel %vm224, %v222, -inf
    %226 = vmax.xlane.f32.xlu0 %v225
    %v227 = vpop.xlane.xlu0 %226
    %v228 = vsel %vm224, %v223, -inf
    %229 = vmax.xlane.f32.xlu0 %v228
    %v230 = vpop.xlane.xlu0 %229
    %v231 = vsub.f32 %v222, %v227
    %v232 = vsub.f32 %v223, %v230
    %v233 = vmul.f32 %v231, 1.442695
    %v234 = vpow.pop %v233
    %v235 = vmul.f32 %v232, 1.442695
    %v236 = vpow.pop %v235
    %v237 = vsel %vm224, %v234, 0.0
    %238 = vadd.xlane.f32.xlu0 %v237
    %v239 = vpop.xlane.xlu0 %238
    %v240 = vsel %vm224, %v236, 0.0
    %241 = vadd.xlane.f32.xlu0 %v240
    %v242 = vpop.xlane.xlu0 %241
    %v243 = vld [vmem:[#allocation7] sm:$0xff]
    %v244 = vld [vmem:[#allocation7 + $0x8] sm:$0xff]
    %v246 = vsel %vm224, %v234, 0
    %248 = vmatprep.subr.mxu0 0.0
    %249 = vmatpush1.msra.mxu0 %v243
    %250 = vmatprep.subr.mxu0 0.0
    %251 = vmatpush1.msra.mxu0 0.0
    %252 = vmatprep.subr.mxu0 0.0
    %253 = vmatpush1.msra.mxu0 0.0
    %254 = vmatprep.subr.mxu0 0.0
    %255 = vmatpush1.msra.mxu0 0.0
    %256 = vmatprep.subr.mxu0 0.0
    %257 = vmatpush1.msra.mxu0 0.0
    %258 = vmatprep.subr.mxu0 0.0
    %259 = vmatpush1.msra.mxu0 0.0
    %260 = vmatprep.subr.mxu0 0.0
    %261 = vmatpush1.msra.mxu0 0.0
    %262 = vmatprep.subr.mxu0 0.0
    %263 = vmatpush1.msra.mxu0 0.0
    %264 = vmatprep.subr.mxu0 0.0
    %265 = vmatpush1.msra.mxu0 0.0
    %266 = vmatprep.subr.mxu0 0.0
    %267 = vmatpush1.msra.mxu0 0.0
    %268 = vmatprep.subr.mxu0 0.0
    %269 = vmatpush1.msra.mxu0 0.0
    %270 = vmatprep.subr.mxu0 0.0
    %271 = vmatpush1.msra.mxu0 0.0
    %272 = vmatprep.subr.mxu0 0.0
    %273 = vmatpush1.msra.mxu0 0.0
    %274 = vmatprep.subr.mxu0 0.0
    %275 = vmatpush1.msra.mxu0 0.0
    %276 = vmatprep.subr.mxu0 0.0
    %277 = vmatpush1.msra.mxu0 0.0
    %278 = vmatprep.subr.mxu0 0.0
    %279 = vmatpush1.msra.mxu0 0.0
    %280 = vmatprep.subr.mxu0 0.0
    %281 = vmatpush1.msra.mxu0 0.0
    %282 = vmatprep.subr.mxu0 0.0
    %283 = vmatpush1.msra.mxu0 0.0
    %284 = vmatprep.subr.mxu0 0.0
    %285 = vmatpush1.msra.mxu0 0.0
    %286 = vmatprep.subr.mxu0 0.0
    %287 = vmatpush1.msra.mxu0 0.0
    %288 = vmatprep.subr.mxu0 0.0
    %289 = vmatpush1.msra.mxu0 0.0
    %290 = vmatprep.subr.mxu0 0.0
    %291 = vmatpush1.msra.mxu0 0.0
    %292 = vmatprep.subr.mxu0 0.0
    %293 = vmatpush1.msra.mxu0 0.0
    %294 = vmatprep.subr.mxu0 0.0
    %295 = vmatpush1.msra.mxu0 0.0
    %296 = vmatprep.subr.mxu0 0.0
    %297 = vmatpush1.msra.mxu0 0.0
    %298 = vmatprep.subr.mxu0 0.0
    %299 = vmatpush1.msra.mxu0 0.0
    %300 = vmatprep.subr.mxu0 0.0
    %301 = vmatpush1.msra.mxu0 0.0
    %302 = vmatprep.subr.mxu0 0.0
    %303 = vmatpush1.msra.mxu0 0.0
    %304 = vmatprep.subr.mxu0 0.0
    %305 = vmatpush1.msra.mxu0 0.0
    %306 = vmatprep.subr.mxu0 0.0
    %307 = vmatpush1.msra.mxu0 0.0
    %308 = vmatprep.subr.mxu0 0.0
    %309 = vmatpush1.msra.mxu0 0.0
    %310 = vmatprep.subr.mxu0 0.0
    %311 = vmatpush1.msra.mxu0 0.0
    %312 = vmatprep.mubr.f32.mxu0 0.0
    %313 = vmatmul.mubr.f32.gmra.mrb[0].mxu0 %v246
    %v314 = vpop.f32.mrb[0].mxu0
    %v315 = vadd.f32 0.0, %v314
    %v316 = vpop.f32.mrb[0].mxu0
    %317 = vdwg.mxu0
    %v319 = vsel %vm224, %v236, 0
    %321 = vmatprep.subr.mxu0 0.0
    %322 = vmatpush1.msra.mxu0 %v244
    %323 = vmatprep.subr.mxu0 0.0
    %324 = vmatpush1.msra.mxu0 0.0
    %325 = vmatprep.subr.mxu0 0.0
    %326 = vmatpush1.msra.mxu0 0.0
    %327 = vmatprep.subr.mxu0 0.0
    %328 = vmatpush1.msra.mxu0 0.0
    %329 = vmatprep.subr.mxu0 0.0
    %330 = vmatpush1.msra.mxu0 0.0
    %331 = vmatprep.subr.mxu0 0.0
    %332 = vmatpush1.msra.mxu0 0.0
    %333 = vmatprep.subr.mxu0 0.0
    %334 = vmatpush1.msra.mxu0 0.0
    %335 = vmatprep.subr.mxu0 0.0
    %336 = vmatpush1.msra.mxu0 0.0
    %337 = vmatprep.subr.mxu0 0.0
    %338 = vmatpush1.msra.mxu0 0.0
    %339 = vmatprep.subr.mxu0 0.0
    %340 = vmatpush1.msra.mxu0 0.0
    %341 = vmatprep.subr.mxu0 0.0
    %342 = vmatpush1.msra.mxu0 0.0
    %343 = vmatprep.subr.mxu0 0.0
    %344 = vmatpush1.msra.mxu0 0.0
    %345 = vmatprep.subr.mxu0 0.0
    %346 = vmatpush1.msra.mxu0 0.0
    %347 = vmatprep.subr.mxu0 0.0
    %348 = vmatpush1.msra.mxu0 0.0
    %349 = vmatprep.subr.mxu0 0.0
    %350 = vmatpush1.msra.mxu0 0.0
    %351 = vmatprep.subr.mxu0 0.0
    %352 = vmatpush1.msra.mxu0 0.0
    %353 = vmatprep.subr.mxu0 0.0
    %354 = vmatpush1.msra.mxu0 0.0
    %355 = vmatprep.subr.mxu0 0.0
    %356 = vmatpush1.msra.mxu0 0.0
    %357 = vmatprep.subr.mxu0 0.0
    %358 = vmatpush1.msra.mxu0 0.0
    %359 = vmatprep.subr.mxu0 0.0
    %360 = vmatpush1.msra.mxu0 0.0
    %361 = vmatprep.subr.mxu0 0.0
    %362 = vmatpush1.msra.mxu0 0.0
    %363 = vmatprep.subr.mxu0 0.0
    %364 = vmatpush1.msra.mxu0 0.0
    %365 = vmatprep.subr.mxu0 0.0
    %366 = vmatpush1.msra.mxu0 0.0
    %367 = vmatprep.subr.mxu0 0.0
    %368 = vmatpush1.msra.mxu0 0.0
    %369 = vmatprep.subr.mxu0 0.0
    %370 = vmatpush1.msra.mxu0 0.0
    %371 = vmatprep.subr.mxu0 0.0
    %372 = vmatpush1.msra.mxu0 0.0
    %373 = vmatprep.subr.mxu0 0.0
    %374 = vmatpush1.msra.mxu0 0.0
    %375 = vmatprep.subr.mxu0 0.0
    %376 = vmatpush1.msra.mxu0 0.0
    %377 = vmatprep.subr.mxu0 0.0
    %378 = vmatpush1.msra.mxu0 0.0
    %379 = vmatprep.subr.mxu0 0.0
    %380 = vmatpush1.msra.mxu0 0.0
    %381 = vmatprep.subr.mxu0 0.0
    %382 = vmatpush1.msra.mxu0 0.0
    %383 = vmatprep.subr.mxu0 0.0
    %384 = vmatpush1.msra.mxu0 0.0
    %385 = vmatprep.mubr.f32.mxu0 0.0
    %386 = vmatmul.mubr.f32.gmra.mrb[0].mxu0 %v319
    %v387 = vpop.f32.mrb[0].mxu0
    %v388 = vadd.f32 0.0, %v387
    %v389 = vpop.f32.mrb[0].mxu0
    %390 = vdwg.mxu0
    %v391 = vrcp.pop %v239
    %v392 = vrcp.pop %v242
    %v393 = vmul.f32 %v315, %v391
    %v394 = vmul.f32 %v388, %v392
    %395 = vst.msk [vmem:[#allocation8] sm:$0xff] %vm62, %v393
    %396 = vst.msk [vmem:[#allocation8 + $0x8] sm:$0xff] %vm62, %v394
    // Predicated region
    $region26: #{tpu_custom_call.1} parent=1 // pred_check
      _
    $region27: #{tpu_custom_call.1} parent=1 // pred_check_branch
      %398 = sbr.rel (0) target = $region29
    $region28: #{tpu_custom_call.1} parent=1 // pred_region
      %s400 = ssub.s32 256, 256
      %401 = vsyncadd [#allocation4], %s400
      %s402 = sshll.u32 [#allocation8], 4
      %s403 = int_to_ptr.vmem [resolvable:$true] %s402
      %408 = dma.vmem_to_hbm [thread:$0]  %s403, 256, %s3, [#allocation4], 128, 128, 8
    $region29: #{tpu_custom_call.1} parent=1 // pred_fallthru
      _
    // Predicated region
    $region30: #{tpu_custom_call.1} parent=1 // pred_check
      _
    $region31: #{tpu_custom_call.1} parent=1 // pred_check_branch
      %410 = sbr.rel (0) target = $region33
    $region32: #{tpu_custom_call.1} parent=1 // pred_region
      %411 = dma.done [#allocation4], 256
    $region33: #{tpu_custom_call.1} parent=1 // pred_fallthru
      _
    %412 = vsyncpa [#allocation3], 1
    %413 = vsyncpa [#allocation6], 1
    %414 = vsyncpa [#allocation4], 1

</llo_original>
